<compile_context>
chip_gen: v6e
topology: v6e:2x2x1
jax: 0.10.0
libtpu: 0.0.40
codegen_flags: <defaults>
</compile_context>

<pallas_src>
import jax
import jax.numpy as jnp
from jax.experimental import pallas as pl
from jax.experimental.pallas import tpu as pltpu

IN_DIM = 100
HID_DIM = 200
OUT_DIM = 10

HID_PAD = 256     # hidden 200 -> 256 (clean MXU / lane tiles)
OUT_PAD = 128     # logits 10 -> 128 lane-dense store
NEG_BIG = -1e30   # padded-logit bias: finite, exp(.) underflows to exactly 0

TB_ALIGN = 16     # bf16 packs (16,128) per vreg -> batch tile multiple of 16


def _cdiv(a, b):
    return -(-a // b)


def _round_up(x, m):
    return _cdiv(x, m) * m


def _choose_tiling(B, *, max_tb=1024, min_steps=2):
    """Adaptive batch tile: multiple of TB_ALIGN, capped at max_tb, split into
    >= min_steps grid steps whenever B is big enough (keeps both v7x
    TensorCores busy and gives the auto-pipeline something to overlap), and
    bounds batch-padding waste to < TB_ALIGN rows in the common case."""
    B_al = _round_up(B, TB_ALIGN)
    n_steps = max(min_steps, _cdiv(B_al, max_tb))
    TB = min(_round_up(_cdiv(B_al, n_steps), TB_ALIGN), B_al)
    B_pad = _round_up(B_al, TB)
    return TB, B_pad


def prepare_params(w1, b1, w2, b2):
    """Pad + cast the static weights ONCE (hoisted out of the per-call path).

    Zero padding is numerically inert through matmul/ReLU (padded hidden
    columns of w1/b1 are zero -> h's padded columns are zero -> padded rows of
    w2 contribute nothing); padded logit lanes get a -1e30 bias so they add
    exactly 0 to the softmax denominator.
    """
    f32, bf16 = jnp.float32, jnp.bfloat16
    w1_p = jnp.zeros((IN_DIM, HID_PAD), f32).at[:, :HID_DIM].set(w1).astype(bf16)
    b1_p = jnp.zeros((1, HID_PAD), f32).at[:, :HID_DIM].set(b1)
    w2_p = jnp.zeros((HID_PAD, OUT_PAD), f32).at[:HID_DIM, :OUT_DIM].set(w2).astype(bf16)
    b2_p = jnp.full((1, OUT_PAD), NEG_BIG, f32).at[:, :OUT_DIM].set(b2)
    return w1_p, b1_p, w2_p, b2_p


def tiny_model_kernel(x_ref, w1_ref, b1_ref, w2_ref, b2_ref, o_ref):
    # Linear1: bf16 operands, f32 MXU accumulation, then bias + ReLU.
    x = x_ref[...]                                                     # [TB, 100] bf16
    h = jnp.dot(x, w1_ref[...], preferred_element_type=jnp.float32)    # [TB, 256] f32
    h = jnp.maximum(h + b1_ref[...], 0.0).astype(jnp.bfloat16)         # ReLU -> bf16
    # Linear2 + bias -> lane-dense padded logits.
    logits = jnp.dot(h, w2_ref[...],
                     preferred_element_type=jnp.float32) + b2_ref[...]  # [TB, 128] f32
    # Numerically stable softmax over the padded 128-wide last dim; padded
    # lanes carry a -1e30 bias so exp() == 0 and they never perturb the sum.
    m = jnp.max(logits, axis=-1, keepdims=True)
    e = jnp.exp(logits - m)
    denom = jnp.sum(e, axis=-1, keepdims=True)
    # [TB,1] op -> perf-irrelevant; exact (approx=False) keeps sum(probs)==1
    # to f32 precision.  approx=True would also pass the bf16-level tolerance.
    inv = pl.reciprocal(denom, approx=False)
    o_ref[...] = (e * inv).astype(o_ref.dtype)


def tiny_model_forward(x, w1_p, b1_p, w2_p, b2_p, *, max_tb=1024):
    """x: [B, 100]; params already padded/cast by prepare_params().
    Returns softmax probabilities [B, 10] in f32."""
    B = x.shape[0]
    TB, B_pad = _choose_tiling(B, max_tb=max_tb)

    # Cast activations to bf16 at the call boundary (halves x DMA bytes).  The
    # last dim stays the real 100 — no HBM copy just to lane-pad; Mosaic pads
    # the 100-lane layout inside VMEM.  Only a handful of batch rows are
    # padded (TB is adaptive), and only when B doesn't already align.
    x_in = x.astype(jnp.bfloat16)
    if B_pad != B:
        x_in = jnp.pad(x_in, ((0, B_pad - B), (0, 0)))

    grid = (B_pad // TB,)

    out_padded = pl.pallas_call(
        tiny_model_kernel,
        out_shape=jax.ShapeDtypeStruct((B_pad, OUT_PAD), jnp.float32),
        grid_spec=pl.GridSpec(
            grid=grid,
            in_specs=[
                pl.BlockSpec((TB, IN_DIM), lambda i: (i, 0)),         # x: streamed over batch
                pl.BlockSpec((IN_DIM, HID_PAD), lambda i: (0, 0)),    # w1: VMEM-resident
                pl.BlockSpec((1, HID_PAD), lambda i: (0, 0)),         # b1: VMEM-resident
                pl.BlockSpec((HID_PAD, OUT_PAD), lambda i: (0, 0)),   # w2: VMEM-resident
                pl.BlockSpec((1, OUT_PAD), lambda i: (0, 0)),         # b2: VMEM-resident
            ],
            out_specs=pl.BlockSpec((TB, OUT_PAD), lambda i: (i, 0)),
        ),
        compiler_params=pltpu.CompilerParams(
            # Batch steps are independent: shard them across the 2 TCs on v7x.
            # (_choose_tiling keeps >= 2 steps whenever B allows; if profiling
            # shows no cross-TC split, switch to pltpu.CORE_PARALLEL.)
            dimension_semantics=("parallel",),
        ),
    )(x_in, w1_p, b1_p, w2_p, b2_p)

    # Strip batch padding and the 118 padded softmax lanes.
    # TODO(synk): if the consumer can take the padded (B_pad, 128) block,
    # return out_padded directly and skip this extra HBM pass.
    return out_padded[:B, :OUT_DIM]


def init_params(key):
    # torch.nn.Linear default init: U[-1/sqrt(fan_in), 1/sqrt(fan_in)].
    k1, k2, k3, k4 = jax.random.split(key, 4)
    bound1 = 1.0 / jnp.sqrt(jnp.float32(IN_DIM))
    bound2 = 1.0 / jnp.sqrt(jnp.float32(HID_DIM))
    w1 = jax.random.uniform(k1, (IN_DIM, HID_DIM), jnp.float32, -bound1, bound1)
    b1 = jax.random.uniform(k2, (1, HID_DIM), jnp.float32, -bound1, bound1)
    w2 = jax.random.uniform(k3, (HID_DIM, OUT_DIM), jnp.float32, -bound2, bound2)
    b2 = jax.random.uniform(k4, (1, OUT_DIM), jnp.float32, -bound2, bound2)
    return w1, b1, w2, b2


if __name__ == "__main__":
    key = jax.random.PRNGKey(0)
    kx, kp = jax.random.split(key)

    B = 8
    x = jax.random.normal(kx, (B, IN_DIM), jnp.float32)
    w1, b1, w2, b2 = init_params(kp)

    padded_params = prepare_params(w1, b1, w2, b2)   # one-time, hoisted
    fwd = jax.jit(lambda xx: tiny_model_forward(xx, *padded_params))

    out = jax.block_until_ready(fwd(x))

    # Pure-JAX f32 reference of the PyTorch forward.  bf16 MXU operands relax
    # the matching tolerance from 1e-5 to ~1e-2 absolute on probabilities.
    h_ref = jnp.maximum(x @ w1 + b1, 0.0)
    ref = jax.nn.softmax(h_ref @ w2 + b2, axis=-1)

    assert out.shape == (B, OUT_DIM)
    assert bool(jnp.all(jnp.isfinite(out)))
    assert float(jnp.max(jnp.abs(out - ref))) < 2e-2
    assert jnp.allclose(jnp.sum(out, axis=-1), 1.0, atol=1e-5)

    print("KERNEL_OK")
</pallas_src>

<mosaic_0001>
module attributes {stable_mosaic.version = 11 : i64} {
  func.func @tiny_model_kernel(%arg0: i32, %arg1: memref<16x100xbf16, #tpu.memory_space<vmem>>, %arg2: memref<100x256xbf16, #tpu.memory_space<vmem>>, %arg3: memref<1x256xf32, #tpu.memory_space<vmem>>, %arg4: memref<256x128xbf16, #tpu.memory_space<vmem>>, %arg5: memref<1x128xf32, #tpu.memory_space<vmem>>, %arg6: memref<16x128xf32, #tpu.memory_space<vmem>>) attributes {dimension_semantics = [#tpu.dimension_semantics<parallel>], iteration_bounds = array<i64: 1>, scalar_prefetch = 0 : i64, scratch_operands = 0 : i64, tpu.core_type = #tpu.core_type<tc>, window_params = [{transform_indices = @transform_0, window_bounds = array<i64: 16, 100>}, {pipeline_mode = #tpu.pipeline_mode<synchronous>, transform_indices = @transform_1, window_bounds = array<i64: 100, 256>}, {pipeline_mode = #tpu.pipeline_mode<synchronous>, transform_indices = @transform_2, window_bounds = array<i64: 1, 256>}, {pipeline_mode = #tpu.pipeline_mode<synchronous>, transform_indices = @transform_3, window_bounds = array<i64: 256, 128>}, {pipeline_mode = #tpu.pipeline_mode<synchronous>, transform_indices = @transform_4, window_bounds = array<i64: 1, 128>}, {transform_indices = @transform_5, window_bounds = array<i64: 16, 128>}]} {
    %c0 = arith.constant 0 : index
    %c0_0 = arith.constant 0 : index
    %0 = vector.load %arg1[%c0, %c0_0] : memref<16x100xbf16, #tpu.memory_space<vmem>>, vector<16x100xbf16>
    %c0_1 = arith.constant 0 : index
    %c0_2 = arith.constant 0 : index
    %1 = vector.load %arg2[%c0_1, %c0_2] : memref<100x256xbf16, #tpu.memory_space<vmem>>, vector<100x256xbf16>
    %cst = arith.constant dense<0.000000e+00> : vector<16x256xf32>
    %2 = tpu.matmul %0, %1, %cst {dimension_numbers = #tpu.dot_dimension_numbers<[1], [0], [0], [1], [0, 0, 1, 1], [], []>} : vector<16x100xbf16>, vector<100x256xbf16>, vector<16x256xf32> -> vector<16x256xf32>
    %c0_3 = arith.constant 0 : index
    %c0_4 = arith.constant 0 : index
    %3 = vector.load %arg3[%c0_3, %c0_4] : memref<1x256xf32, #tpu.memory_space<vmem>>, vector<1x256xf32>
    %4 = vector.broadcast %3 : vector<1x256xf32> to vector<16x256xf32>
    %5 = arith.addf %2, %4 : vector<16x256xf32>
    %cst_5 = arith.constant 0.000000e+00 : f32
    %6 = vector.broadcast %cst_5 : f32 to vector<16x256xf32>
    %7 = arith.maximumf %5, %6 : vector<16x256xf32>
    %8 = arith.truncf %7 : vector<16x256xf32> to vector<16x256xbf16>
    %c0_6 = arith.constant 0 : index
    %c0_7 = arith.constant 0 : index
    %9 = vector.load %arg4[%c0_6, %c0_7] : memref<256x128xbf16, #tpu.memory_space<vmem>>, vector<256x128xbf16>
    %cst_8 = arith.constant dense<0.000000e+00> : vector<16x128xf32>
    %10 = tpu.matmul %8, %9, %cst_8 {dimension_numbers = #tpu.dot_dimension_numbers<[1], [0], [0], [1], [0, 0, 1, 1], [], []>} : vector<16x256xbf16>, vector<256x128xbf16>, vector<16x128xf32> -> vector<16x128xf32>
    %c0_9 = arith.constant 0 : index
    %c0_10 = arith.constant 0 : index
    %11 = vector.load %arg5[%c0_9, %c0_10] : memref<1x128xf32, #tpu.memory_space<vmem>>, vector<1x128xf32>
    %12 = vector.broadcast %11 : vector<1x128xf32> to vector<16x128xf32>
    %13 = arith.addf %10, %12 : vector<16x128xf32>
    %cst_11 = arith.constant dense<0xFF800000> : vector<16xf32>
    %14 = vector.multi_reduction <maximumf>, %13, %cst_11 [1] : vector<16x128xf32> to vector<16xf32>
    %15 = vector.shape_cast %14 : vector<16xf32> to vector<16x1xf32>
    %16 = vector.broadcast %15 : vector<16x1xf32> to vector<16x128xf32>
    %17 = arith.subf %13, %16 : vector<16x128xf32>
    %18 = math.exp %17 : vector<16x128xf32>
    %cst_12 = arith.constant dense<0.000000e+00> : vector<16xf32>
    %19 = vector.multi_reduction <add>, %18, %cst_12 [1] : vector<16x128xf32> to vector<16xf32>
    %20 = vector.shape_cast %19 : vector<16xf32> to vector<16x1xf32>
    %21 = tpu.reciprocal %20 : vector<16x1xf32> -> vector<16x1xf32>
    %22 = vector.broadcast %21 : vector<16x1xf32> to vector<16x128xf32>
    %23 = arith.mulf %18, %22 : vector<16x128xf32>
    %c0_13 = arith.constant 0 : index
    %c0_14 = arith.constant 0 : index
    %24 = vector.load %arg6[%c0_13, %c0_14] : memref<16x128xf32, #tpu.memory_space<vmem>>, vector<16x128xf32>
    tpu.vector_store %arg6[%c0_13, %c0_14], %23 {strides = array<i32>} : memref<16x128xf32, #tpu.memory_space<vmem>>, vector<16x128xf32>,
    return
  }
  func.func @transform_0(%arg0: i32) -> (i32, i32) {
    %c0_i32 = arith.constant 0 : i32
    %c0_i32_0 = arith.constant 0 : i32
    return %arg0, %c0_i32 : i32, i32
  }
  func.func @transform_1(%arg0: i32) -> (i32, i32) {
    %c0_i32 = arith.constant 0 : i32
    %c0_i32_0 = arith.constant 0 : i32
    %c0_i32_1 = arith.constant 0 : i32
    return %c0_i32, %c0_i32_0 : i32, i32
  }
  func.func @transform_2(%arg0: i32) -> (i32, i32) {
    %c0_i32 = arith.constant 0 : i32
    %c0_i32_0 = arith.constant 0 : i32
    %c0_i32_1 = arith.constant 0 : i32
    return %c0_i32, %c0_i32_0 : i32, i32
  }
  func.func @transform_3(%arg0: i32) -> (i32, i32) {
    %c0_i32 = arith.constant 0 : i32
    %c0_i32_0 = arith.constant 0 : i32
    %c0_i32_1 = arith.constant 0 : i32
    return %c0_i32, %c0_i32_0 : i32, i32
  }
  func.func @transform_4(%arg0: i32) -> (i32, i32) {
    %c0_i32 = arith.constant 0 : i32
    %c0_i32_0 = arith.constant 0 : i32
    %c0_i32_1 = arith.constant 0 : i32
    return %c0_i32, %c0_i32_0 : i32, i32
  }
  func.func @transform_5(%arg0: i32) -> (i32, i32) {
    %c0_i32 = arith.constant 0 : i32
    %c0_i32_0 = arith.constant 0 : i32
    return %arg0, %c0_i32 : i32, i32
  }
}

</mosaic_0001>

<llo_original>
// kernel: _lambda_.1
$region0: #{_lambda_.1}
  #allocation0 [shape = 'u32[]', space=smem, size = 0x4, offset = 0x4, fixed_abs, tag = 'smem constant byte address 0x4 - core index']
  #allocation1 [shape = 'u32[144,128]{1,0:T(1,128)}', space=vmem, size = 0x12000, scoped, tag = 'internal scratch']
  %s0 = inlined_call_operand.vmem [shape: bf16[16,100], index: 0, kind: input, shape index: {}]
  %s1 = inlined_call_operand.hbm [shape: bf16[100,256], index: 1, kind: input, shape index: {}]
  %s2 = inlined_call_operand.vmem [shape: f32[1,256], index: 2, kind: input, shape index: {}]
  %s3 = inlined_call_operand.hbm [shape: bf16[256,128], index: 3, kind: input, shape index: {}]
  %s4 = inlined_call_operand.vmem [shape: f32[1,128], index: 4, kind: input, shape index: {}]
  %s5 = inlined_call_operand.vmem [shape: f32[16,128], index: 5, kind: output, shape index: {}]
  %s6 = sld [smem:[#allocation0]]
  $region38: #{_lambda_.1} parent=0
    _
  %s8 = ssub.s32 1, %s6
  %s9 = scalar_select 0, %s8, %s6
  $region1: #{_lambda_.1} parent=0
    #allocation2 [shape = 'u8[53248]{0}', space=vmem, size = 0xd000, scoped, tag = 'input window, operand 1, single buffered']
    #allocation3 [shape = 's32[1]{0}', space=sflag, size = 0x4, scoped, tag = 'scoped memory for _lambda_.1']
    #allocation4 [shape = 'u8[65536]{0}', space=vmem, size = 0x10000, scoped, tag = 'input window, operand 3, single buffered']
    #allocation5 [shape = 's32[1]{0}', space=sflag, size = 0x4, scoped, tag = 'scoped memory for _lambda_.1']
    %10 = vsyncpa [#allocation3], 0
    %11 = vsyncpa [#allocation5], 0
    // Predicated region
    $region2: #{_lambda_.1} parent=1 // pred_check
      _
    $region3: #{_lambda_.1} parent=1 // pred_check_branch
      %13 = sbr.rel (0) target = $region5
    $region4: #{_lambda_.1} parent=1 // pred_region
      _
    $region5: #{_lambda_.1} parent=1 // pred_fallthru
      _
    // Predicated region
    $region6: #{_lambda_.1} parent=1 // pred_check
      _
    $region7: #{_lambda_.1} parent=1 // pred_check_branch
      %15 = sbr.rel (0) target = $region9
    $region8: #{_lambda_.1} parent=1 // pred_region
      %s17 = ssub.s32 1664, 1664
      %18 = vsyncadd [#allocation3], %s17
      %s19 = sshll.u32 [#allocation2], 4
      %s20 = int_to_ptr.vmem [resolvable:$true] %s19
      %25 = dma.hbm_to_vmem [thread:$0]  %s1, 1664, %s20, [#allocation3], 128, 128, 8
    $region9: #{_lambda_.1} parent=1 // pred_fallthru
      _
    // Predicated region
    $region10: #{_lambda_.1} parent=1 // pred_check
      _
    $region11: #{_lambda_.1} parent=1 // pred_check_branch
      %27 = sbr.rel (0) target = $region13
    $region12: #{_lambda_.1} parent=1 // pred_region
      _
    $region13: #{_lambda_.1} parent=1 // pred_fallthru
      _
    // Predicated region
    $region14: #{_lambda_.1} parent=1 // pred_check
      _
    $region15: #{_lambda_.1} parent=1 // pred_check_branch
      %29 = sbr.rel (0) target = $region17
    $region16: #{_lambda_.1} parent=1 // pred_region
      %s31 = ssub.s32 2048, 2048
      %32 = vsyncadd [#allocation5], %s31
      %s33 = sshll.u32 [#allocation4], 4
      %s34 = int_to_ptr.vmem [resolvable:$true] %s33
      %39 = dma.hbm_to_vmem [thread:$0]  %s3, 2048, %s34, [#allocation5], 64, 64, 4
    $region17: #{_lambda_.1} parent=1 // pred_fallthru
      _
    // Predicated region
    $region18: #{_lambda_.1} parent=1 // pred_check
      _
    $region19: #{_lambda_.1} parent=1 // pred_check_branch
      %41 = sbr.rel (0) target = $region21
    $region20: #{_lambda_.1} parent=1 // pred_region
      _
    $region21: #{_lambda_.1} parent=1 // pred_fallthru
      _
    // Predicated region
    $region22: #{_lambda_.1} parent=1 // pred_check
      _
    $region23: #{_lambda_.1} parent=1 // pred_check_branch
      %43 = sbr.rel (0) target = $region25
    $region24: #{_lambda_.1} parent=1 // pred_region
      %44 = dma.done [#allocation3], 1664
    $region25: #{_lambda_.1} parent=1 // pred_fallthru
      _
    // Predicated region
    $region26: #{_lambda_.1} parent=1 // pred_check
      _
    $region27: #{_lambda_.1} parent=1 // pred_check_branch
      %46 = sbr.rel (0) target = $region29
    $region28: #{_lambda_.1} parent=1 // pred_region
      %47 = dma.done [#allocation5], 2048
    $region29: #{_lambda_.1} parent=1 // pred_fallthru
      _
    %v49 = vld [vmem:[%s0] sm:$0xf]
    %v50 = vld [vmem:[%s0 + $0x4] sm:$0xf]
    %v51 = vld [vmem:[#allocation2] sm:$0xff]
    %v52 = vld [vmem:[#allocation2 + $0x8] sm:$0xff]
    %v53 = vld [vmem:[#allocation2 + $0x10] sm:$0xff]
    %v54 = vld [vmem:[#allocation2 + $0x18] sm:$0xff]
    %v55 = vld [vmem:[#allocation2 + $0x20] sm:$0xff]
    %v56 = vld [vmem:[#allocation2 + $0x28] sm:$0xff]
    %v57 = vld [vmem:[#allocation2 + $0x30] sm:$0xff]
    %v58 = vld [vmem:[#allocation2 + $0x38] sm:$0xff]
    %v59 = vld [vmem:[#allocation2 + $0x40] sm:$0xff]
    %v60 = vld [vmem:[#allocation2 + $0x48] sm:$0xff]
    %v61 = vld [vmem:[#allocation2 + $0x50] sm:$0xff]
    %v62 = vld [vmem:[#allocation2 + $0x58] sm:$0xff]
    %v63 = vld [vmem:[#allocation2 + $0x60] sm:$0x33]
    %v64 = vld [vmem:[%s2] sm:$0x3]
    %v66 = vlaneseq
    %v67 = vshrl.u32 %v66, 7
    %v68 = vsub.s32 0, %v67
    %v69 = vrot.slane %v64, %v68
    %v70 = vlaneseq
    %v71 = vshrl.u32 %v70, 7
    %v72 = vsub.s32 1, %v71
    %v73 = vrot.slane %v64, %v72
    %v78 = vunpack.c.l.b16 %v49
    %v79 = vunpack.c.l.b16 %v50
    %v80 = vpack.c.b16 %v79, %v78
    %v94 = vunpack.c.l.b16 %v51
    %v95 = vunpack.c.h.b16 %v51
    %v96 = vunpack.c.l.b16 %v52
    %v97 = vunpack.c.h.b16 %v52
    %v98 = vunpack.c.l.b16 %v53
    %v99 = vunpack.c.h.b16 %v53
    %v100 = vunpack.c.l.b16 %v54
    %v101 = vunpack.c.h.b16 %v54
    %v102 = vunpack.c.l.b16 %v55
    %v103 = vunpack.c.h.b16 %v55
    %v104 = vunpack.c.l.b16 %v56
    %v105 = vunpack.c.h.b16 %v56
    %v106 = vunpack.c.l.b16 %v57
    %v107 = vunpack.c.h.b16 %v57
    %v108 = vunpack.c.l.b16 %v58
    %v109 = vunpack.c.h.b16 %v58
    %v110 = vunpack.c.l.b16 %v59
    %v111 = vunpack.c.h.b16 %v59
    %v112 = vunpack.c.l.b16 %v60
    %v113 = vunpack.c.h.b16 %v60
    %v114 = vunpack.c.l.b16 %v61
    %v115 = vunpack.c.h.b16 %v61
    %v116 = vunpack.c.l.b16 %v62
    %v117 = vunpack.c.h.b16 %v62
    %v118 = vunpack.c.l.b16 %v63
    %v119 = vunpack.c.h.b16 %v63
    %v120 = vpack.c.b16 %v96, %v94
    %v121 = vpack.c.b16 %v97, %v95
    %v122 = vpack.c.b16 %v100, %v98
    %v123 = vpack.c.b16 %v101, %v99
    %v124 = vpack.c.b16 %v104, %v102
    %v125 = vpack.c.b16 %v105, %v103
    %v126 = vpack.c.b16 %v108, %v106
    %v127 = vpack.c.b16 %v109, %v107
    %v128 = vpack.c.b16 %v112, %v110
    %v129 = vpack.c.b16 %v113, %v111
    %v130 = vpack.c.b16 %v116, %v114
    %v131 = vpack.c.b16 %v117, %v115
    %v132 = vpack.c.b16 %v118, %v118
    %v133 = vpack.c.b16 %v119, %v119
    %vm146 = vcmask 818176
    %v148 = vsel %vm146, %v80, 0
    %vm150 = vcmask 1041408
    %v152 = vsel %vm150, %v132, 0
    %v155 = vsel %vm150, %v133, 0
    %157 = vmatprep.subr.bf16.mxu0 0
    %158 = vmatpush1.bf16.msra.mxu0 0
    %159 = vmatprep.subr.bf16.mxu0 %v155
    %160 = vmatpush1.bf16.msra.mxu0 %v152
    %161 = vmatprep.subr.bf16.mxu0 %v131
    %162 = vmatpush1.bf16.msra.mxu0 %v130
    %163 = vmatprep.subr.bf16.mxu0 %v129
    %164 = vmatpush1.bf16.msra.mxu0 %v128
    %165 = vmatprep.subr.bf16.mxu0 %v127
    %166 = vmatpush1.bf16.msra.mxu0 %v126
    %167 = vmatprep.subr.bf16.mxu0 %v125
    %168 = vmatpush1.bf16.msra.mxu0 %v124
    %169 = vmatprep.subr.bf16.mxu0 %v123
    %170 = vmatpush1.bf16.msra.mxu0 %v122
    %171 = vmatprep.subr.bf16.mxu0 %v121
    %172 = vmatpush1.bf16.msra.mxu0 %v120
    %173 = vmatprep.subr.bf16.mxu0 0
    %174 = vmatpush2.bf16.msra.mxu0 0
    %175 = vmatprep.subr.bf16.mxu0 0
    %176 = vmatpush2.bf16.msra.mxu0 0
    %177 = vmatprep.subr.bf16.mxu0 0
    %178 = vmatpush2.bf16.msra.mxu0 0
    %179 = vmatprep.subr.bf16.mxu0 0
    %180 = vmatpush2.bf16.msra.mxu0 0
    %181 = vmatprep.subr.bf16.mxu0 0
    %182 = vmatpush2.bf16.msra.mxu0 0
    %183 = vmatprep.subr.bf16.mxu0 0
    %184 = vmatpush2.bf16.msra.mxu0 0
    %185 = vmatprep.subr.bf16.mxu0 0
    %186 = vmatpush2.bf16.msra.mxu0 0
    %187 = vmatprep.subr.bf16.mxu0 0
    %188 = vmatpush2.bf16.msra.mxu0 0
    %189 = vmatprep.mubr.bf16.mxu0 0
    %190 = vmatmul.mubr.bf16.gmra.mxu0 %v148
    %v191 = vpop.f32.mrf.mxu0
    %v192 = vadd.f32 %v69, %v191
    %v193 = vpop.f32.mrf.mxu0
    %v194 = vadd.f32 %v73, %v193
    %v195 = vpop.f32.mrf.mxu0
    %v196 = vadd.f32 %v69, %v195
    %v197 = vpop.f32.mrf.mxu0
    %v198 = vadd.f32 %v73, %v197
    %199 = vdwg.mxu0
    %v200 = vmax.f32 %v192, 0.0
    %v201 = vmax.f32 %v194, 0.0
    %v202 = vmax.f32 %v196, 0.0
    %v203 = vmax.f32 %v198, 0.0
    %v204 = vpack.c.bf16 %v202, %v200
    %v205 = vpack.c.bf16 %v203, %v201
    %v206 = vld [vmem:[#allocation4] sm:$0xf]
    %v207 = vld [vmem:[#allocation4 + $0x4] sm:$0xf]
    %v208 = vld [vmem:[#allocation4 + $0x8] sm:$0xf]
    %v209 = vld [vmem:[#allocation4 + $0xc] sm:$0xf]
    %v210 = vld [vmem:[#allocation4 + $0x10] sm:$0xf]
    %v211 = vld [vmem:[#allocation4 + $0x14] sm:$0xf]
    %v212 = vld [vmem:[#allocation4 + $0x18] sm:$0xf]
    %v213 = vld [vmem:[#allocation4 + $0x1c] sm:$0xf]
    %v214 = vld [vmem:[#allocation4 + $0x20] sm:$0xf]
    %v215 = vld [vmem:[#allocation4 + $0x24] sm:$0xf]
    %v216 = vld [vmem:[#allocation4 + $0x28] sm:$0xf]
    %v217 = vld [vmem:[#allocation4 + $0x2c] sm:$0xf]
    %v218 = vld [vmem:[#allocation4 + $0x30] sm:$0xf]
    %v219 = vld [vmem:[#allocation4 + $0x34] sm:$0xf]
    %v220 = vld [vmem:[#allocation4 + $0x38] sm:$0xf]
    %v221 = vld [vmem:[#allocation4 + $0x3c] sm:$0xf]
    %v222 = vld [vmem:[#allocation4 + $0x40] sm:$0xf]
    %v223 = vld [vmem:[#allocation4 + $0x44] sm:$0xf]
    %v224 = vld [vmem:[#allocation4 + $0x48] sm:$0xf]
    %v225 = vld [vmem:[#allocation4 + $0x4c] sm:$0xf]
    %v226 = vld [vmem:[#allocation4 + $0x50] sm:$0xf]
    %v227 = vld [vmem:[#allocation4 + $0x54] sm:$0xf]
    %v228 = vld [vmem:[#allocation4 + $0x58] sm:$0xf]
    %v229 = vld [vmem:[#allocation4 + $0x5c] sm:$0xf]
    %v230 = vld [vmem:[#allocation4 + $0x60] sm:$0xf]
    %v231 = vld [vmem:[#allocation4 + $0x64] sm:$0xf]
    %v232 = vld [vmem:[#allocation4 + $0x68] sm:$0xf]
    %v233 = vld [vmem:[#allocation4 + $0x6c] sm:$0xf]
    %v234 = vld [vmem:[#allocation4 + $0x70] sm:$0xf]
    %v235 = vld [vmem:[#allocation4 + $0x74] sm:$0xf]
    %v236 = vld [vmem:[#allocation4 + $0x78] sm:$0xf]
    %v237 = vld [vmem:[#allocation4 + $0x7c] sm:$0xf]
    %v238 = vld [vmem:[%s4] sm:$0x1]
    %v240 = vlaneseq
    %v241 = vshrl.u32 %v240, 7
    %v242 = vsub.s32 0, %v241
    %v243 = vrot.slane %v238, %v242
    %v277 = vunpack.c.l.b16 %v206
    %v278 = vunpack.c.l.b16 %v207
    %v279 = vunpack.c.l.b16 %v208
    %v280 = vunpack.c.l.b16 %v209
    %v281 = vunpack.c.l.b16 %v210
    %v282 = vunpack.c.l.b16 %v211
    %v283 = vunpack.c.l.b16 %v212
    %v284 = vunpack.c.l.b16 %v213
    %v285 = vunpack.c.l.b16 %v214
    %v286 = vunpack.c.l.b16 %v215
    %v287 = vunpack.c.l.b16 %v216
    %v288 = vunpack.c.l.b16 %v217
    %v289 = vunpack.c.l.b16 %v218
    %v290 = vunpack.c.l.b16 %v219
    %v291 = vunpack.c.l.b16 %v220
    %v292 = vunpack.c.l.b16 %v221
    %v293 = vunpack.c.l.b16 %v222
    %v294 = vunpack.c.l.b16 %v223
    %v295 = vunpack.c.l.b16 %v224
    %v296 = vunpack.c.l.b16 %v225
    %v297 = vunpack.c.l.b16 %v226
    %v298 = vunpack.c.l.b16 %v227
    %v299 = vunpack.c.l.b16 %v228
    %v300 = vunpack.c.l.b16 %v229
    %v301 = vunpack.c.l.b16 %v230
    %v302 = vunpack.c.l.b16 %v231
    %v303 = vunpack.c.l.b16 %v232
    %v304 = vunpack.c.l.b16 %v233
    %v305 = vunpack.c.l.b16 %v234
    %v306 = vunpack.c.l.b16 %v235
    %v307 = vunpack.c.l.b16 %v236
    %v308 = vunpack.c.l.b16 %v237
    %v309 = vpack.c.b16 %v278, %v277
    %v310 = vpack.c.b16 %v280, %v279
    %v311 = vpack.c.b16 %v282, %v281
    %v312 = vpack.c.b16 %v284, %v283
    %v313 = vpack.c.b16 %v286, %v285
    %v314 = vpack.c.b16 %v288, %v287
    %v315 = vpack.c.b16 %v290, %v289
    %v316 = vpack.c.b16 %v292, %v291
    %v317 = vpack.c.b16 %v294, %v293
    %v318 = vpack.c.b16 %v296, %v295
    %v319 = vpack.c.b16 %v298, %v297
    %v320 = vpack.c.b16 %v300, %v299
    %v321 = vpack.c.b16 %v302, %v301
    %v322 = vpack.c.b16 %v304, %v303
    %v323 = vpack.c.b16 %v306, %v305
    %v324 = vpack.c.b16 %v308, %v307
    %341 = vmatprep.subr.bf16.mxu0 0
    %342 = vmatpush1.bf16.msra.mxu0 %v316
    %343 = vmatprep.subr.bf16.mxu0 0
    %344 = vmatpush1.bf16.msra.mxu0 %v315
    %345 = vmatprep.subr.bf16.mxu0 0
    %346 = vmatpush1.bf16.msra.mxu0 %v314
    %347 = vmatprep.subr.bf16.mxu0 0
    %348 = vmatpush1.bf16.msra.mxu0 %v313
    %349 = vmatprep.subr.bf16.mxu0 0
    %350 = vmatpush1.bf16.msra.mxu0 %v312
    %351 = vmatprep.subr.bf16.mxu0 0
    %352 = vmatpush1.bf16.msra.mxu0 %v311
    %353 = vmatprep.subr.bf16.mxu0 0
    %354 = vmatpush1.bf16.msra.mxu0 %v310
    %355 = vmatprep.subr.bf16.mxu0 0
    %356 = vmatpush1.bf16.msra.mxu0 %v309
    %357 = vmatprep.subr.bf16.mxu0 0
    %358 = vmatpush2.bf16.msra.mxu0 %v324
    %359 = vmatprep.subr.bf16.mxu0 0
    %360 = vmatpush2.bf16.msra.mxu0 %v323
    %361 = vmatprep.subr.bf16.mxu0 0
    %362 = vmatpush2.bf16.msra.mxu0 %v322
    %363 = vmatprep.subr.bf16.mxu0 0
    %364 = vmatpush2.bf16.msra.mxu0 %v321
    %365 = vmatprep.subr.bf16.mxu0 0
    %366 = vmatpush2.bf16.msra.mxu0 %v320
    %367 = vmatprep.subr.bf16.mxu0 0
    %368 = vmatpush2.bf16.msra.mxu0 %v319
    %369 = vmatprep.subr.bf16.mxu0 0
    %370 = vmatpush2.bf16.msra.mxu0 %v318
    %371 = vmatprep.subr.bf16.mxu0 0
    %372 = vmatpush2.bf16.msra.mxu0 %v317
    %373 = vmatprep.mubr.bf16.mxu0 %v205
    %374 = vmatmul.mubr.bf16.gmra.mxu0 %v204
    %v375 = vpop.f32.mrf.mxu0
    %v376 = vadd.f32 %v243, %v375
    %v377 = vpop.f32.mrf.mxu0
    %v378 = vpop.f32.mrf.mxu0
    %v379 = vadd.f32 %v243, %v378
    %v380 = vpop.f32.mrf.mxu0
    %381 = vdwg.mxu0
    %382 = vmax.xlane.f32.xlu0 %v376
    %v383 = vpop.xlane.xlu0 %382
    %384 = vmax.xlane.f32.xlu0 %v379
    %v385 = vpop.xlane.xlu0 %384
    %v386 = vsub.f32 %v376, %v383
    %v387 = vsub.f32 %v379, %v385
    %v388 = vmul.f32 %v386, 1.442695
    %v389 = vpow.pop %v388
    %v390 = vmul.f32 %v387, 1.442695
    %v391 = vpow.pop %v390
    %392 = vadd.xlane.f32.xlu0 %v389
    %v393 = vpop.xlane.xlu0 %392
    %394 = vadd.xlane.f32.xlu0 %v391
    %v395 = vpop.xlane.xlu0 %394
    %v396 = vrcp.pop %v393
    %v397 = vrcp.pop %v395
    %v398 = vmul.f32 %v389, %v396
    %v399 = vmul.f32 %v391, %v397
    %400 = vst [vmem:[%s5] sm:$0xff] %v398
    %401 = vst [vmem:[%s5 + $0x8] sm:$0xff] %v399
    // Predicated region
    $region30: #{_lambda_.1} parent=1 // pred_check
      _
    $region31: #{_lambda_.1} parent=1 // pred_check_branch
      %403 = sbr.rel (0) target = $region33
    $region32: #{_lambda_.1} parent=1 // pred_region
      _
    $region33: #{_lambda_.1} parent=1 // pred_fallthru
      _
    // Predicated region
    $region34: #{_lambda_.1} parent=1 // pred_check
      _
    $region35: #{_lambda_.1} parent=1 // pred_check_branch
      %405 = sbr.rel (0) target = $region37
    $region36: #{_lambda_.1} parent=1 // pred_region
      _
    $region37: #{_lambda_.1} parent=1 // pred_fallthru
      _
    %406 = vsyncpa [#allocation3], 1
    %407 = vsyncpa [#allocation5], 1

</llo_original>
